<compile_context>
chip_gen: v6e
topology: v6e:2x2x1
jax: 0.10.0
libtpu: 0.0.40
codegen_flags: <defaults>
</compile_context>

<pallas_src>
import functools

import jax
import jax.numpy as jnp
from jax.experimental import pallas as pl
from jax.experimental.pallas import tpu as pltpu

LANE = 128


def _round_up(n, m):
    return ((n + m - 1) // m) * m


def _actor_kernel(x_ref, w1_ref, b1_ref, w2_ref, b2_ref, w3_ref, b3_ref,
                  o_ref, *, max_action):
    # Transposed layout: batch rides the lane dimension.
    #   x_ref : (S,  tb) bf16            -- streamed per grid step
    #   wK_ref: (out, in) bf16, resident -- W^T used as the MXU LHS
    #   bK_ref: (out, 1) f32,  resident  -- lane-broadcast bias
    #   o_ref : (A,  tb) f32             -- lane-dense output tile
    x = x_ref[...]                                                    # (S, tb)
    h1 = jnp.dot(w1_ref[...], x, preferred_element_type=jnp.float32)
    h1 = jnp.maximum(h1 + b1_ref[...], 0.0)                           # (H1, tb) f32
    h2 = jnp.dot(w2_ref[...], h1.astype(w2_ref.dtype),
                 preferred_element_type=jnp.float32)
    h2 = jnp.maximum(h2 + b2_ref[...], 0.0)                           # (H2, tb) f32
    h3 = jnp.dot(w3_ref[...], h2.astype(w3_ref.dtype),
                 preferred_element_type=jnp.float32) + b3_ref[...]    # (A, tb) f32
    o_ref[...] = (max_action * jnp.tanh(h3)).astype(o_ref.dtype)


def actor_forward(x, params, max_action, *, block_b=1024, dot_dtype=jnp.bfloat16):
    """x: (B, state_dim) f32. params: dict with w1,b1,w2,b2,w3,b3 (weights stored (in,out))."""
    w1, b1 = params["w1"], params["b1"]
    w2, b2 = params["w2"], params["b2"]
    w3, b3 = params["w3"], params["b3"]
    B, S = x.shape
    H1, H2, A = w1.shape[1], w2.shape[1], w3.shape[1]

    # Transposed bf16 weights (W^T) so the kernel computes W^T @ x^T; f32
    # column biases (out, 1) broadcast along the lane/batch dimension.
    w1t = w1.T.astype(dot_dtype)               # (H1, S)
    w2t = w2.T.astype(dot_dtype)               # (H2, H1)
    w3t = w3.T.astype(dot_dtype)               # (A,  H2)
    b1c = b1.reshape(H1, 1).astype(jnp.float32)
    b2c = b2.reshape(H2, 1).astype(jnp.float32)
    b3c = b3.reshape(A, 1).astype(jnp.float32)

    # Batch tiling: lane-aligned (multiple of 128), balanced so padding is
    # bounded, and >=2 (even) grid steps when B allows so both v7x TCs work.
    b_lane = _round_up(B, LANE)
    n_tiles = max(1, pl.cdiv(b_lane, block_b))
    if n_tiles == 1 and b_lane >= 2 * LANE:
        n_tiles = 2
    if n_tiles > 1 and n_tiles % 2:
        n_tiles += 1
    tb = _round_up(pl.cdiv(b_lane, n_tiles), LANE)
    b_pad = tb * n_tiles

    # x -> bf16, transpose once in the wrapper, pad the batch (lane) axis.
    x_t = x.astype(dot_dtype).T                # (S, B)
    if b_pad != B:
        x_t = jnp.pad(x_t, ((0, 0), (0, b_pad - B)))

    # TODO(synk): pass max_action as an SMEM scalar if it varies at runtime
    # (currently baked in, so a new value retraces).
    kernel = functools.partial(_actor_kernel, max_action=float(max_action))

    # Parameter blocks cover the full array and ignore the grid index, so they
    # are DMA'd once and stay resident in VMEM across all batch tiles.
    def resident(arr):
        return pl.BlockSpec(arr.shape, lambda i: (0,) * arr.ndim)

    out_t = pl.pallas_call(
        kernel,
        out_shape=jax.ShapeDtypeStruct((A, b_pad), jnp.float32),
        grid=(n_tiles,),
        in_specs=[
            pl.BlockSpec((S, tb), lambda i: (0, i)),   # x^T: streamed per batch tile
            resident(w1t), resident(b1c),
            resident(w2t), resident(b2c),
            resident(w3t), resident(b3c),
        ],
        out_specs=pl.BlockSpec((A, tb), lambda i: (0, i)),
        compiler_params=pltpu.CompilerParams(
            dimension_semantics=("parallel",)),        # shard batch over v7x's 2 TCs
    )(x_t, w1t, b1c, w2t, b2c, w3t, b3c)

    # (A, b_pad) -> (B, A); tiny transpose in the wrapper.
    return out_t[:, :B].T


def init_actor_params(key, state_dim, action_dim, hidden=64):
    """Deterministic init mimicking nn.Linear's U(-1/sqrt(fan_in), 1/sqrt(fan_in))."""
    ks = jax.random.split(key, 6)

    def linear(kw, kb, fan_in, fan_out):
        bound = 1.0 / jnp.sqrt(jnp.float32(fan_in))
        w = jax.random.uniform(kw, (fan_in, fan_out), jnp.float32, -bound, bound)
        b = jax.random.uniform(kb, (fan_out,), jnp.float32, -bound, bound)
        return w, b

    w1, b1 = linear(ks[0], ks[1], state_dim, hidden)
    w2, b2 = linear(ks[2], ks[3], hidden, hidden)
    w3, b3 = linear(ks[4], ks[5], hidden, action_dim)
    return {"w1": w1, "b1": b1, "w2": w2, "b2": b2, "w3": w3, "b3": b3}


def actor_ref(x, params, max_action):
    # Full-f32 reference (PyTorch semantics).
    h = jnp.maximum(x @ params["w1"] + params["b1"], 0.0)
    h = jnp.maximum(h @ params["w2"] + params["b2"], 0.0)
    return max_action * jnp.tanh(h @ params["w3"] + params["b3"])


if __name__ == "__main__":
    key = jax.random.PRNGKey(0)
    k_param, k_x = jax.random.split(key)

    batch = 12          # deliberately not a multiple of 128 to exercise padding
    state_dim = 16
    action_dim = 4
    max_action = 2.0

    params = init_actor_params(k_param, state_dim, action_dim)
    x = jax.random.normal(k_x, (batch, state_dim), jnp.float32)

    out = actor_forward(x, params, max_action)
    out = jax.block_until_ready(out)

    expected = actor_ref(x, params, max_action)
    assert out.shape == (batch, action_dim)
    # bf16 MXU inputs (f32 accumulate) perturb results slightly vs the pure-f32
    # reference; tolerance loosened accordingly.
    assert jnp.allclose(out, expected, atol=2e-2, rtol=2e-2), \
        f"max abs err = {jnp.max(jnp.abs(out - expected))}"

    print("KERNEL_OK")
</pallas_src>

<mosaic_0001>
module attributes {stable_mosaic.version = 11 : i64} {
  func.func @_actor_kernel(%arg0: i32, %arg1: memref<16x128xbf16, #tpu.memory_space<vmem>>, %arg2: memref<64x16xbf16, #tpu.memory_space<vmem>>, %arg3: memref<64x1xf32, #tpu.memory_space<vmem>>, %arg4: memref<64x64xbf16, #tpu.memory_space<vmem>>, %arg5: memref<64x1xf32, #tpu.memory_space<vmem>>, %arg6: memref<4x64xbf16, #tpu.memory_space<vmem>>, %arg7: memref<4x1xf32, #tpu.memory_space<vmem>>, %arg8: memref<4x128xf32, #tpu.memory_space<vmem>>) attributes {dimension_semantics = [#tpu.dimension_semantics<parallel>], iteration_bounds = array<i64: 1>, scalar_prefetch = 0 : i64, scratch_operands = 0 : i64, tpu.core_type = #tpu.core_type<tc>, window_params = [{transform_indices = @transform_0, window_bounds = array<i64: 16, 128>}, {pipeline_mode = #tpu.pipeline_mode<synchronous>, transform_indices = @transform_1, window_bounds = array<i64: 64, 16>}, {pipeline_mode = #tpu.pipeline_mode<synchronous>, transform_indices = @transform_2, window_bounds = array<i64: 64, 1>}, {pipeline_mode = #tpu.pipeline_mode<synchronous>, transform_indices = @transform_3, window_bounds = array<i64: 64, 64>}, {pipeline_mode = #tpu.pipeline_mode<synchronous>, transform_indices = @transform_4, window_bounds = array<i64: 64, 1>}, {pipeline_mode = #tpu.pipeline_mode<synchronous>, transform_indices = @transform_5, window_bounds = array<i64: 4, 64>}, {pipeline_mode = #tpu.pipeline_mode<synchronous>, transform_indices = @transform_6, window_bounds = array<i64: 4, 1>}, {transform_indices = @transform_7, window_bounds = array<i64: 4, 128>}]} {
    %c0 = arith.constant 0 : index
    %c0_0 = arith.constant 0 : index
    %0 = vector.load %arg1[%c0, %c0_0] : memref<16x128xbf16, #tpu.memory_space<vmem>>, vector<16x128xbf16>
    %c0_1 = arith.constant 0 : index
    %c0_2 = arith.constant 0 : index
    %1 = vector.load %arg2[%c0_1, %c0_2] : memref<64x16xbf16, #tpu.memory_space<vmem>>, vector<64x16xbf16>
    %cst = arith.constant dense<0.000000e+00> : vector<64x128xf32>
    %2 = tpu.matmul %1, %0, %cst {dimension_numbers = #tpu.dot_dimension_numbers<[1], [0], [0], [1], [0, 0, 1, 1], [], []>} : vector<64x16xbf16>, vector<16x128xbf16>, vector<64x128xf32> -> vector<64x128xf32>
    %c0_3 = arith.constant 0 : index
    %c0_4 = arith.constant 0 : index
    %3 = vector.load %arg3[%c0_3, %c0_4] : memref<64x1xf32, #tpu.memory_space<vmem>>, vector<64x1xf32>
    %4 = vector.broadcast %3 : vector<64x1xf32> to vector<64x128xf32>
    %5 = arith.addf %2, %4 : vector<64x128xf32>
    %cst_5 = arith.constant 0.000000e+00 : f32
    %6 = vector.broadcast %cst_5 : f32 to vector<64x128xf32>
    %7 = arith.maximumf %5, %6 : vector<64x128xf32>
    %c0_6 = arith.constant 0 : index
    %c0_7 = arith.constant 0 : index
    %8 = vector.load %arg4[%c0_6, %c0_7] : memref<64x64xbf16, #tpu.memory_space<vmem>>, vector<64x64xbf16>
    %9 = arith.truncf %7 : vector<64x128xf32> to vector<64x128xbf16>
    %cst_8 = arith.constant dense<0.000000e+00> : vector<64x128xf32>
    %10 = tpu.matmul %8, %9, %cst_8 {dimension_numbers = #tpu.dot_dimension_numbers<[1], [0], [0], [1], [0, 0, 1, 1], [], []>} : vector<64x64xbf16>, vector<64x128xbf16>, vector<64x128xf32> -> vector<64x128xf32>
    %c0_9 = arith.constant 0 : index
    %c0_10 = arith.constant 0 : index
    %11 = vector.load %arg5[%c0_9, %c0_10] : memref<64x1xf32, #tpu.memory_space<vmem>>, vector<64x1xf32>
    %12 = vector.broadcast %11 : vector<64x1xf32> to vector<64x128xf32>
    %13 = arith.addf %10, %12 : vector<64x128xf32>
    %cst_11 = arith.constant 0.000000e+00 : f32
    %14 = vector.broadcast %cst_11 : f32 to vector<64x128xf32>
    %15 = arith.maximumf %13, %14 : vector<64x128xf32>
    %c0_12 = arith.constant 0 : index
    %c0_13 = arith.constant 0 : index
    %16 = vector.load %arg6[%c0_12, %c0_13] : memref<4x64xbf16, #tpu.memory_space<vmem>>, vector<4x64xbf16>
    %17 = arith.truncf %15 : vector<64x128xf32> to vector<64x128xbf16>
    %cst_14 = arith.constant dense<0.000000e+00> : vector<4x128xf32>
    %18 = tpu.matmul %16, %17, %cst_14 {dimension_numbers = #tpu.dot_dimension_numbers<[1], [0], [0], [1], [0, 0, 1, 1], [], []>} : vector<4x64xbf16>, vector<64x128xbf16>, vector<4x128xf32> -> vector<4x128xf32>
    %c0_15 = arith.constant 0 : index
    %c0_16 = arith.constant 0 : index
    %19 = vector.load %arg7[%c0_15, %c0_16] : memref<4x1xf32, #tpu.memory_space<vmem>>, vector<4x1xf32>
    %20 = vector.broadcast %19 : vector<4x1xf32> to vector<4x128xf32>
    %21 = arith.addf %18, %20 : vector<4x128xf32>
    %22 = math.tanh %21 : vector<4x128xf32>
    %cst_17 = arith.constant 2.000000e+00 : f32
    %23 = vector.broadcast %cst_17 : f32 to vector<4x128xf32>
    %24 = arith.mulf %23, %22 : vector<4x128xf32>
    %c0_18 = arith.constant 0 : index
    %c0_19 = arith.constant 0 : index
    %25 = vector.load %arg8[%c0_18, %c0_19] : memref<4x128xf32, #tpu.memory_space<vmem>>, vector<4x128xf32>
    tpu.vector_store %arg8[%c0_18, %c0_19], %24 {strides = array<i32>} : memref<4x128xf32, #tpu.memory_space<vmem>>, vector<4x128xf32>,
    return
  }
  func.func @transform_0(%arg0: i32) -> (i32, i32) {
    %c0_i32 = arith.constant 0 : i32
    %c0_i32_0 = arith.constant 0 : i32
    return %c0_i32, %arg0 : i32, i32
  }
  func.func @transform_1(%arg0: i32) -> (i32, i32) {
    %c0_i32 = arith.constant 0 : i32
    %c0_i32_0 = arith.constant 0 : i32
    %c0_i32_1 = arith.constant 0 : i32
    return %c0_i32, %c0_i32_0 : i32, i32
  }
  func.func @transform_2(%arg0: i32) -> (i32, i32) {
    %c0_i32 = arith.constant 0 : i32
    %c0_i32_0 = arith.constant 0 : i32
    %c0_i32_1 = arith.constant 0 : i32
    return %c0_i32, %c0_i32_0 : i32, i32
  }
  func.func @transform_3(%arg0: i32) -> (i32, i32) {
    %c0_i32 = arith.constant 0 : i32
    %c0_i32_0 = arith.constant 0 : i32
    %c0_i32_1 = arith.constant 0 : i32
    return %c0_i32, %c0_i32_0 : i32, i32
  }
  func.func @transform_4(%arg0: i32) -> (i32, i32) {
    %c0_i32 = arith.constant 0 : i32
    %c0_i32_0 = arith.constant 0 : i32
    %c0_i32_1 = arith.constant 0 : i32
    return %c0_i32, %c0_i32_0 : i32, i32
  }
  func.func @transform_5(%arg0: i32) -> (i32, i32) {
    %c0_i32 = arith.constant 0 : i32
    %c0_i32_0 = arith.constant 0 : i32
    %c0_i32_1 = arith.constant 0 : i32
    return %c0_i32, %c0_i32_0 : i32, i32
  }
  func.func @transform_6(%arg0: i32) -> (i32, i32) {
    %c0_i32 = arith.constant 0 : i32
    %c0_i32_0 = arith.constant 0 : i32
    %c0_i32_1 = arith.constant 0 : i32
    return %c0_i32, %c0_i32_0 : i32, i32
  }
  func.func @transform_7(%arg0: i32) -> (i32, i32) {
    %c0_i32 = arith.constant 0 : i32
    %c0_i32_0 = arith.constant 0 : i32
    return %c0_i32, %arg0 : i32, i32
  }
}

</mosaic_0001>

<llo_original>
// kernel: tpu_custom_call.1
$region0: #{tpu_custom_call.1}
  #allocation0 [shape = 'u32[]', space=smem, size = 0x4, offset = 0x4, fixed_abs, tag = 'smem constant byte address 0x4 - core index']
  #allocation1 [shape = 'u32[144,128]{1,0:T(1,128)}', space=vmem, size = 0x12000, scoped, tag = 'internal scratch']
  %s0 = inlined_call_operand.vmem [shape: bf16[16,128], index: 0, kind: input, shape index: {}]
  %s1 = inlined_call_operand.vmem [shape: bf16[64,16], index: 1, kind: input, shape index: {}]
  %s2 = inlined_call_operand.vmem [shape: f32[64,1], index: 2, kind: input, shape index: {}]
  %s3 = inlined_call_operand.vmem [shape: bf16[64,64], index: 3, kind: input, shape index: {}]
  %s4 = inlined_call_operand.vmem [shape: f32[64,1], index: 4, kind: input, shape index: {}]
  %s5 = inlined_call_operand.vmem [shape: bf16[4,64], index: 5, kind: input, shape index: {}]
  %s6 = inlined_call_operand.vmem [shape: f32[4,1], index: 6, kind: input, shape index: {}]
  %s7 = inlined_call_operand.hbm [shape: f32[4,128], index: 7, kind: output, shape index: {}]
  %s8 = sld [smem:[#allocation0]]
  $region38: #{tpu_custom_call.1} parent=0
    _
  %s10 = ssub.s32 1, %s8
  %s11 = scalar_select 0, %s10, %s8
  $region1: #{tpu_custom_call.1} parent=0
    #allocation2 [shape = 'u8[2048]{0}', space=vmem, size = 0x800, scoped, tag = 'output window, operand 0, single buffered']
    #allocation3 [shape = 's32[1]{0}', space=sflag, size = 0x4, scoped, tag = 'scoped memory for tpu_custom_call.1']
    %12 = vsyncpa [#allocation3], 0
    // Predicated region
    $region2: #{tpu_custom_call.1} parent=1 // pred_check
      _
    $region3: #{tpu_custom_call.1} parent=1 // pred_check_branch
      %14 = sbr.rel (0) target = $region5
    $region4: #{tpu_custom_call.1} parent=1 // pred_region
      _
    $region5: #{tpu_custom_call.1} parent=1 // pred_fallthru
      _
    // Predicated region
    $region6: #{tpu_custom_call.1} parent=1 // pred_check
      _
    $region7: #{tpu_custom_call.1} parent=1 // pred_check_branch
      %16 = sbr.rel (0) target = $region9
    $region8: #{tpu_custom_call.1} parent=1 // pred_region
      _
    $region9: #{tpu_custom_call.1} parent=1 // pred_fallthru
      _
    // Predicated region
    $region10: #{tpu_custom_call.1} parent=1 // pred_check
      _
    $region11: #{tpu_custom_call.1} parent=1 // pred_check_branch
      %18 = sbr.rel (0) target = $region13
    $region12: #{tpu_custom_call.1} parent=1 // pred_region
      _
    $region13: #{tpu_custom_call.1} parent=1 // pred_fallthru
      _
    // Predicated region
    $region14: #{tpu_custom_call.1} parent=1 // pred_check
      _
    $region15: #{tpu_custom_call.1} parent=1 // pred_check_branch
      %20 = sbr.rel (0) target = $region17
    $region16: #{tpu_custom_call.1} parent=1 // pred_region
      _
    $region17: #{tpu_custom_call.1} parent=1 // pred_fallthru
      _
    // Predicated region
    $region18: #{tpu_custom_call.1} parent=1 // pred_check
      _
    $region19: #{tpu_custom_call.1} parent=1 // pred_check_branch
      %22 = sbr.rel (0) target = $region21
    $region20: #{tpu_custom_call.1} parent=1 // pred_region
      _
    $region21: #{tpu_custom_call.1} parent=1 // pred_fallthru
      _
    // Predicated region
    $region22: #{tpu_custom_call.1} parent=1 // pred_check
      _
    $region23: #{tpu_custom_call.1} parent=1 // pred_check_branch
      %24 = sbr.rel (0) target = $region25
    $region24: #{tpu_custom_call.1} parent=1 // pred_region
      _
    $region25: #{tpu_custom_call.1} parent=1 // pred_fallthru
      _
    // Predicated region
    $region26: #{tpu_custom_call.1} parent=1 // pred_check
      _
    $region27: #{tpu_custom_call.1} parent=1 // pred_check_branch
      %26 = sbr.rel (0) target = $region29
    $region28: #{tpu_custom_call.1} parent=1 // pred_region
      _
    $region29: #{tpu_custom_call.1} parent=1 // pred_fallthru
      _
    %v28 = vld [vmem:[%s0] sm:$0xf]
    %v29 = vld [vmem:[%s0 + $0x4] sm:$0xf]
    %v30 = vld [vmem:[%s1] sm:$0xf]
    %v31 = vld [vmem:[%s1 + $0x4] sm:$0xf]
    %v32 = vld [vmem:[%s1 + $0x8] sm:$0xf]
    %v33 = vld [vmem:[%s1 + $0xc] sm:$0xf]
    %v34 = vld [vmem:[%s1 + $0x10] sm:$0xf]
    %v35 = vld [vmem:[%s1 + $0x14] sm:$0xf]
    %v36 = vld [vmem:[%s1 + $0x18] sm:$0xf]
    %v37 = vld [vmem:[%s1 + $0x1c] sm:$0xf]
    %v38 = vld [vmem:[%s2] sm:$0xff]
    %v39 = vld [vmem:[%s2 + $0x8] sm:$0xff]
    %v40 = vld [vmem:[%s2 + $0x10] sm:$0xff]
    %v41 = vld [vmem:[%s2 + $0x18] sm:$0xff]
    %v42 = vld [vmem:[%s2 + $0x20] sm:$0xff]
    %v43 = vld [vmem:[%s2 + $0x28] sm:$0xff]
    %v44 = vld [vmem:[%s2 + $0x30] sm:$0xff]
    %v45 = vld [vmem:[%s2 + $0x38] sm:$0xff]
    %47 = vset.pattern.permute.xlu0 0
    %48 = vperm.xlu0 %47, %v38
    %v49 = vpop.permute.xlu0 %48
    %52 = vset.pattern.permute.xlu0 0
    %53 = vperm.xlu0 %52, %v39
    %v54 = vpop.permute.xlu0 %53
    %57 = vset.pattern.permute.xlu0 0
    %58 = vperm.xlu0 %57, %v40
    %v59 = vpop.permute.xlu0 %58
    %62 = vset.pattern.permute.xlu0 0
    %63 = vperm.xlu0 %62, %v41
    %v64 = vpop.permute.xlu0 %63
    %67 = vset.pattern.permute.xlu0 0
    %68 = vperm.xlu0 %67, %v42
    %v69 = vpop.permute.xlu0 %68
    %72 = vset.pattern.permute.xlu0 0
    %73 = vperm.xlu0 %72, %v43
    %v74 = vpop.permute.xlu0 %73
    %77 = vset.pattern.permute.xlu0 0
    %78 = vperm.xlu0 %77, %v44
    %v79 = vpop.permute.xlu0 %78
    %82 = vset.pattern.permute.xlu0 0
    %83 = vperm.xlu0 %82, %v45
    %v84 = vpop.permute.xlu0 %83
    %v94 = vunpack.c.l.b16 %v30
    %v95 = vunpack.c.l.b16 %v31
    %v96 = vunpack.c.l.b16 %v32
    %v97 = vunpack.c.l.b16 %v33
    %v98 = vunpack.c.l.b16 %v34
    %v99 = vunpack.c.l.b16 %v35
    %v100 = vunpack.c.l.b16 %v36
    %v101 = vunpack.c.l.b16 %v37
    %v102 = vpack.c.b16 %v95, %v94
    %v103 = vpack.c.b16 %v97, %v96
    %v104 = vpack.c.b16 %v99, %v98
    %v105 = vpack.c.b16 %v101, %v100
    %v108 = vunpack.c.l.b16 %v28
    %v109 = vunpack.c.l.b16 %v29
    %v110 = vpack.c.b16 %v109, %v108
    %vm112 = vcmask 130048
    %v114 = vsel %vm112, %v102, 0
    %v117 = vsel %vm112, %v103, 0
    %v120 = vsel %vm112, %v104, 0
    %v123 = vsel %vm112, %v105, 0
    %125 = vmatprep.subr.bf16.mxu0 0
    %126 = vmatpush1.bf16.msra.mxu0 0
    %127 = vmatprep.subr.bf16.mxu0 0
    %128 = vmatpush1.bf16.msra.mxu0 0
    %129 = vmatprep.subr.bf16.mxu0 0
    %130 = vmatpush1.bf16.msra.mxu0 0
    %131 = vmatprep.subr.bf16.mxu0 0
    %132 = vmatpush1.bf16.msra.mxu0 0
    %133 = vmatprep.subr.bf16.mxu0 0
    %134 = vmatpush1.bf16.msra.mxu0 0
    %135 = vmatprep.subr.bf16.mxu0 0
    %136 = vmatpush1.bf16.msra.mxu0 0
    %137 = vmatprep.subr.bf16.mxu0 0
    %138 = vmatpush1.bf16.msra.mxu0 0
    %139 = vmatprep.subr.bf16.mxu0 0
    %140 = vmatpush1.bf16.msra.mxu0 %v110
    %141 = vmatprep.subr.bf16.mxu0 0
    %142 = vmatpush2.bf16.msra.mxu0 0
    %143 = vmatprep.subr.bf16.mxu0 0
    %144 = vmatpush2.bf16.msra.mxu0 0
    %145 = vmatprep.subr.bf16.mxu0 0
    %146 = vmatpush2.bf16.msra.mxu0 0
    %147 = vmatprep.subr.bf16.mxu0 0
    %148 = vmatpush2.bf16.msra.mxu0 0
    %149 = vmatprep.subr.bf16.mxu0 0
    %150 = vmatpush2.bf16.msra.mxu0 0
    %151 = vmatprep.subr.bf16.mxu0 0
    %152 = vmatpush2.bf16.msra.mxu0 0
    %153 = vmatprep.subr.bf16.mxu0 0
    %154 = vmatpush2.bf16.msra.mxu0 0
    %155 = vmatprep.subr.bf16.mxu0 0
    %156 = vmatpush2.bf16.msra.mxu0 0
    %157 = vmatprep.mubr.bf16.mxu0 0
    %158 = vmatmul.mubr.bf16.gmra.mxu0 %v114
    %v159 = vpop.f32.mrf.mxu0
    %v160 = vadd.f32 %v49, %v159
    %v161 = vpop.f32.mrf.mxu0
    %v162 = vpop.f32.mrf.mxu0
    %v163 = vadd.f32 %v54, %v162
    %v164 = vpop.f32.mrf.mxu0
    %165 = vmatprep.mubr.bf16.mxu0 0
    %166 = vmatmul.mubr.bf16.gmra.mxu0 %v117
    %v167 = vpop.f32.mrf.mxu0
    %v168 = vadd.f32 %v59, %v167
    %v169 = vpop.f32.mrf.mxu0
    %v170 = vpop.f32.mrf.mxu0
    %v171 = vadd.f32 %v64, %v170
    %v172 = vpop.f32.mrf.mxu0
    %173 = vmatprep.mubr.bf16.mxu0 0
    %174 = vmatmul.mubr.bf16.gmra.mxu0 %v120
    %v175 = vpop.f32.mrf.mxu0
    %v176 = vadd.f32 %v69, %v175
    %v177 = vpop.f32.mrf.mxu0
    %v178 = vpop.f32.mrf.mxu0
    %v179 = vadd.f32 %v74, %v178
    %v180 = vpop.f32.mrf.mxu0
    %181 = vmatprep.mubr.bf16.mxu0 0
    %182 = vmatmul.mubr.bf16.gmra.mxu0 %v123
    %v183 = vpop.f32.mrf.mxu0
    %v184 = vadd.f32 %v79, %v183
    %v185 = vpop.f32.mrf.mxu0
    %v186 = vpop.f32.mrf.mxu0
    %v187 = vadd.f32 %v84, %v186
    %v188 = vpop.f32.mrf.mxu0
    %189 = vdwg.mxu0
    %v190 = vmax.f32 %v160, 0.0
    %v191 = vmax.f32 %v163, 0.0
    %v192 = vmax.f32 %v168, 0.0
    %v193 = vmax.f32 %v171, 0.0
    %v194 = vmax.f32 %v176, 0.0
    %v195 = vmax.f32 %v179, 0.0
    %v196 = vmax.f32 %v184, 0.0
    %v197 = vmax.f32 %v187, 0.0
    %v198 = vld [vmem:[%s3] sm:$0xf]
    %v199 = vld [vmem:[%s3 + $0x4] sm:$0xf]
    %v200 = vld [vmem:[%s3 + $0x8] sm:$0xf]
    %v201 = vld [vmem:[%s3 + $0xc] sm:$0xf]
    %v202 = vld [vmem:[%s3 + $0x10] sm:$0xf]
    %v203 = vld [vmem:[%s3 + $0x14] sm:$0xf]
    %v204 = vld [vmem:[%s3 + $0x18] sm:$0xf]
    %v205 = vld [vmem:[%s3 + $0x1c] sm:$0xf]
    %v206 = vpack.c.bf16 %v191, %v190
    %v207 = vpack.c.bf16 %v193, %v192
    %v208 = vpack.c.bf16 %v195, %v194
    %v209 = vpack.c.bf16 %v197, %v196
    %v210 = vld [vmem:[%s4] sm:$0xff]
    %v211 = vld [vmem:[%s4 + $0x8] sm:$0xff]
    %v212 = vld [vmem:[%s4 + $0x10] sm:$0xff]
    %v213 = vld [vmem:[%s4 + $0x18] sm:$0xff]
    %v214 = vld [vmem:[%s4 + $0x20] sm:$0xff]
    %v215 = vld [vmem:[%s4 + $0x28] sm:$0xff]
    %v216 = vld [vmem:[%s4 + $0x30] sm:$0xff]
    %v217 = vld [vmem:[%s4 + $0x38] sm:$0xff]
    %219 = vset.pattern.permute.xlu0 0
    %220 = vperm.xlu0 %219, %v210
    %v221 = vpop.permute.xlu0 %220
    %224 = vset.pattern.permute.xlu0 0
    %225 = vperm.xlu0 %224, %v211
    %v226 = vpop.permute.xlu0 %225
    %229 = vset.pattern.permute.xlu0 0
    %230 = vperm.xlu0 %229, %v212
    %v231 = vpop.permute.xlu0 %230
    %234 = vset.pattern.permute.xlu0 0
    %235 = vperm.xlu0 %234, %v213
    %v236 = vpop.permute.xlu0 %235
    %239 = vset.pattern.permute.xlu0 0
    %240 = vperm.xlu0 %239, %v214
    %v241 = vpop.permute.xlu0 %240
    %244 = vset.pattern.permute.xlu0 0
    %245 = vperm.xlu0 %244, %v215
    %v246 = vpop.permute.xlu0 %245
    %249 = vset.pattern.permute.xlu0 0
    %250 = vperm.xlu0 %249, %v216
    %v251 = vpop.permute.xlu0 %250
    %254 = vset.pattern.permute.xlu0 0
    %255 = vperm.xlu0 %254, %v217
    %v256 = vpop.permute.xlu0 %255
    %v266 = vunpack.c.l.b16 %v198
    %v267 = vunpack.c.l.b16 %v199
    %v268 = vunpack.c.l.b16 %v200
    %v269 = vunpack.c.l.b16 %v201
    %v270 = vunpack.c.l.b16 %v202
    %v271 = vunpack.c.l.b16 %v203
    %v272 = vunpack.c.l.b16 %v204
    %v273 = vunpack.c.l.b16 %v205
    %v274 = vpack.c.b16 %v267, %v266
    %v275 = vpack.c.b16 %v269, %v268
    %v276 = vpack.c.b16 %v271, %v270
    %v277 = vpack.c.b16 %v273, %v272
    %vm278 = vcmask 523264
    %v280 = vsel %vm278, %v274, 0
    %v283 = vsel %vm278, %v275, 0
    %v286 = vsel %vm278, %v276, 0
    %v289 = vsel %vm278, %v277, 0
    %291 = vmatprep.subr.bf16.mxu0 0
    %292 = vmatpush1.bf16.msra.mxu0 0
    %293 = vmatprep.subr.bf16.mxu0 0
    %294 = vmatpush1.bf16.msra.mxu0 0
    %295 = vmatprep.subr.bf16.mxu0 0
    %296 = vmatpush1.bf16.msra.mxu0 0
    %297 = vmatprep.subr.bf16.mxu0 0
    %298 = vmatpush1.bf16.msra.mxu0 0
    %299 = vmatprep.subr.bf16.mxu0 0
    %300 = vmatpush1.bf16.msra.mxu0 %v209
    %301 = vmatprep.subr.bf16.mxu0 0
    %302 = vmatpush1.bf16.msra.mxu0 %v208
    %303 = vmatprep.subr.bf16.mxu0 0
    %304 = vmatpush1.bf16.msra.mxu0 %v207
    %305 = vmatprep.subr.bf16.mxu0 0
    %306 = vmatpush1.bf16.msra.mxu0 %v206
    %307 = vmatprep.subr.bf16.mxu0 0
    %308 = vmatpush2.bf16.msra.mxu0 0
    %309 = vmatprep.subr.bf16.mxu0 0
    %310 = vmatpush2.bf16.msra.mxu0 0
    %311 = vmatprep.subr.bf16.mxu0 0
    %312 = vmatpush2.bf16.msra.mxu0 0
    %313 = vmatprep.subr.bf16.mxu0 0
    %314 = vmatpush2.bf16.msra.mxu0 0
    %315 = vmatprep.subr.bf16.mxu0 0
    %316 = vmatpush2.bf16.msra.mxu0 0
    %317 = vmatprep.subr.bf16.mxu0 0
    %318 = vmatpush2.bf16.msra.mxu0 0
    %319 = vmatprep.subr.bf16.mxu0 0
    %320 = vmatpush2.bf16.msra.mxu0 0
    %321 = vmatprep.subr.bf16.mxu0 0
    %322 = vmatpush2.bf16.msra.mxu0 0
    %323 = vmatprep.mubr.bf16.mxu0 0
    %324 = vmatmul.mubr.bf16.gmra.mxu0 %v280
    %v325 = vpop.f32.mrf.mxu0
    %v326 = vadd.f32 %v221, %v325
    %v327 = vpop.f32.mrf.mxu0
    %v328 = vpop.f32.mrf.mxu0
    %v329 = vadd.f32 %v226, %v328
    %v330 = vpop.f32.mrf.mxu0
    %331 = vmatprep.mubr.bf16.mxu0 0
    %332 = vmatmul.mubr.bf16.gmra.mxu0 %v283
    %v333 = vpop.f32.mrf.mxu0
    %v334 = vadd.f32 %v231, %v333
    %v335 = vpop.f32.mrf.mxu0
    %v336 = vpop.f32.mrf.mxu0
    %v337 = vadd.f32 %v236, %v336
    %v338 = vpop.f32.mrf.mxu0
    %339 = vmatprep.mubr.bf16.mxu0 0
    %340 = vmatmul.mubr.bf16.gmra.mxu0 %v286
    %v341 = vpop.f32.mrf.mxu0
    %v342 = vadd.f32 %v241, %v341
    %v343 = vpop.f32.mrf.mxu0
    %v344 = vpop.f32.mrf.mxu0
    %v345 = vadd.f32 %v246, %v344
    %v346 = vpop.f32.mrf.mxu0
    %347 = vmatprep.mubr.bf16.mxu0 0
    %348 = vmatmul.mubr.bf16.gmra.mxu0 %v289
    %v349 = vpop.f32.mrf.mxu0
    %v350 = vadd.f32 %v251, %v349
    %v351 = vpop.f32.mrf.mxu0
    %v352 = vpop.f32.mrf.mxu0
    %v353 = vadd.f32 %v256, %v352
    %v354 = vpop.f32.mrf.mxu0
    %355 = vdwg.mxu0
    %v356 = vmax.f32 %v326, 0.0
    %v357 = vmax.f32 %v329, 0.0
    %v358 = vmax.f32 %v334, 0.0
    %v359 = vmax.f32 %v337, 0.0
    %v360 = vmax.f32 %v342, 0.0
    %v361 = vmax.f32 %v345, 0.0
    %v362 = vmax.f32 %v350, 0.0
    %v363 = vmax.f32 %v353, 0.0
    %v364 = vld [vmem:[%s5] sm:$0x3]
    %v365 = vpack.c.bf16 %v357, %v356
    %v366 = vpack.c.bf16 %v359, %v358
    %v367 = vpack.c.bf16 %v361, %v360
    %v368 = vpack.c.bf16 %v363, %v362
    %v369 = vld [vmem:[%s6] sm:$0xf]
    %371 = vset.pattern.permute.xlu0 0
    %372 = vperm.xlu0 %371, %v369
    %v373 = vpop.permute.xlu0 %372
    %v376 = vsel %vm278, %v364, 0
    %378 = vmatprep.subr.bf16.mxu0 0
    %379 = vmatpush1.bf16.msra.mxu0 0
    %380 = vmatprep.subr.bf16.mxu0 0
    %381 = vmatpush1.bf16.msra.mxu0 0
    %382 = vmatprep.subr.bf16.mxu0 0
    %383 = vmatpush1.bf16.msra.mxu0 0
    %384 = vmatprep.subr.bf16.mxu0 0
    %385 = vmatpush1.bf16.msra.mxu0 0
    %386 = vmatprep.subr.bf16.mxu0 0
    %387 = vmatpush1.bf16.msra.mxu0 %v368
    %388 = vmatprep.subr.bf16.mxu0 0
    %389 = vmatpush1.bf16.msra.mxu0 %v367
    %390 = vmatprep.subr.bf16.mxu0 0
    %391 = vmatpush1.bf16.msra.mxu0 %v366
    %392 = vmatprep.subr.bf16.mxu0 0
    %393 = vmatpush1.bf16.msra.mxu0 %v365
    %394 = vmatprep.subr.bf16.mxu0 0
    %395 = vmatpush2.bf16.msra.mxu0 0
    %396 = vmatprep.subr.bf16.mxu0 0
    %397 = vmatpush2.bf16.msra.mxu0 0
    %398 = vmatprep.subr.bf16.mxu0 0
    %399 = vmatpush2.bf16.msra.mxu0 0
    %400 = vmatprep.subr.bf16.mxu0 0
    %401 = vmatpush2.bf16.msra.mxu0 0
    %402 = vmatprep.subr.bf16.mxu0 0
    %403 = vmatpush2.bf16.msra.mxu0 0
    %404 = vmatprep.subr.bf16.mxu0 0
    %405 = vmatpush2.bf16.msra.mxu0 0
    %406 = vmatprep.subr.bf16.mxu0 0
    %407 = vmatpush2.bf16.msra.mxu0 0
    %408 = vmatprep.subr.bf16.mxu0 0
    %409 = vmatpush2.bf16.msra.mxu0 0
    %410 = vmatprep.mubr.bf16.mxu0 0
    %411 = vmatmul.mubr.bf16.gmra.mxu0 %v376
    %v412 = vpop.f32.mrf.mxu0
    %v413 = vadd.f32 %v373, %v412
    %v414 = vpop.f32.mrf.mxu0
    %v415 = vpop.f32.mrf.mxu0
    %v416 = vpop.f32.mrf.mxu0
    %417 = vdwg.mxu0
    %v418 = vtanh.pop %v413
    %v419 = vmul.f32 %v418, 2.0
    %420 = vst [vmem:[#allocation2] sm:$0xf] %v419
    // Predicated region
    $region30: #{tpu_custom_call.1} parent=1 // pred_check
      _
    $region31: #{tpu_custom_call.1} parent=1 // pred_check_branch
      %422 = sbr.rel (0) target = $region33
    $region32: #{tpu_custom_call.1} parent=1 // pred_region
      %s424 = ssub.s32 64, 64
      %425 = vsyncadd [#allocation3], %s424
      %s427 = sshll.u32 [#allocation2], 4
      %s428 = int_to_ptr.vmem [resolvable:$true] %s427
      %430 = dma.vmem_to_hbm [thread:$0]  %s428, 64, %s7, [#allocation3]
    $region33: #{tpu_custom_call.1} parent=1 // pred_fallthru
      _
    // Predicated region
    $region34: #{tpu_custom_call.1} parent=1 // pred_check
      _
    $region35: #{tpu_custom_call.1} parent=1 // pred_check_branch
      %432 = sbr.rel (0) target = $region37
    $region36: #{tpu_custom_call.1} parent=1 // pred_region
      %433 = dma.done [#allocation3], 64
    $region37: #{tpu_custom_call.1} parent=1 // pred_fallthru
      _
    %434 = vsyncpa [#allocation3], 1

</llo_original>
